<compile_context>
chip_gen: v6e
topology: v6e:2x2x1
jax: 0.10.0
libtpu: 0.0.40
codegen_flags: <defaults>
</compile_context>

<pallas_src>
import functools
import math

import jax
import jax.numpy as jnp
from jax import lax
from jax.experimental import pallas as pl
from jax.experimental.pallas import tpu as pltpu


def _round_up(x, m):
    return (x + m - 1) // m * m


def _tpu_caps():
    """(vmem_capacity_bytes, num_tensorcores) with conservative fallbacks."""
    vmem_cap = 64 << 20  # conservative (v7x per-TC) if detection fails
    num_cores = 1
    try:
        info = pltpu.get_tpu_info()
        vmem_cap = int(getattr(info, "vmem_capacity_bytes", vmem_cap) or vmem_cap)
        for name in ("num_cores", "tensorcore_count", "num_tensorcores", "cores_per_chip"):
            v = getattr(info, name, None)
            if v:
                num_cores = max(1, int(v))
                break
    except Exception:
        pass
    return vmem_cap, num_cores


def ffn_kernel(x_ref, gamma_ref, beta_ref, w1_ref, b1_ref, w2_ref, b2_ref, o_ref,
               *scratch, d_model: int, eps: float, single_inner: bool):
    """One (tm, dm_pad) row tile; optional inner (d_inner) streaming via grid axis 1."""
    dm_pad = x_ref.shape[-1]

    def layer_norm_bf16():
        x = x_ref[...].astype(jnp.float32)
        inv_d = 1.0 / d_model
        mean = jnp.sum(x, axis=-1, keepdims=True) * inv_d
        centered = x - mean
        if dm_pad != d_model:
            # Invariant: wrapper zero-pads lanes >= d_model, so the mean above is exact;
            # mask 'centered' so padded lanes do not bias the variance.
            col = lax.broadcasted_iota(jnp.int32, (1, dm_pad), 1)
            centered = jnp.where(col < d_model, centered, 0.0)
        var = jnp.sum(centered * centered, axis=-1, keepdims=True) * inv_d
        xn = centered * lax.rsqrt(var + eps)
        xn = xn * gamma_ref[...] + beta_ref[...]
        return xn.astype(jnp.bfloat16)

    if single_inner:
        # Resident-weight path: fc1 -> ReLU -> fc2 -> +residual in one shot.
        xn = layer_norm_bf16()
        h = jnp.maximum(
            jnp.dot(xn, w1_ref[...], preferred_element_type=jnp.float32) + b1_ref[...],
            0.0).astype(jnp.bfloat16)
        y = jnp.dot(h, w2_ref[...], preferred_element_type=jnp.float32) + b2_ref[...]
        o_ref[...] = (y + x_ref[...].astype(jnp.float32)).astype(o_ref.dtype)
    else:
        # d_inner streaming path: accumulate partial fc2 products over the inner grid axis.
        xn_ref, acc_ref = scratch
        k = pl.program_id(1)

        @pl.when(k == 0)
        def _():
            xn_ref[...] = layer_norm_bf16()
            acc_ref[...] = jnp.zeros_like(acc_ref)

        h = jnp.maximum(
            jnp.dot(xn_ref[...], w1_ref[...], preferred_element_type=jnp.float32)
            + b1_ref[...], 0.0).astype(jnp.bfloat16)
        acc_ref[...] += jnp.dot(h, w2_ref[...], preferred_element_type=jnp.float32)

        @pl.when(k == pl.num_programs(1) - 1)
        def _():
            o_ref[...] = (acc_ref[...] + b2_ref[...]
                          + x_ref[...].astype(jnp.float32)).astype(o_ref.dtype)


def pack_ffn_params(gamma, beta, w1, b1, w2, b2):
    """One-time weight packing: lane-pad to multiples of 128 and cast weights to bf16.

    Hoisted out of the forward so the HBM pad/cast pass happens once per model, not per call.
    """
    d_model, d_inner = int(w1.shape[0]), int(w1.shape[1])
    dm_pad = _round_up(d_model, 128)
    di_pad = _round_up(d_inner, 128)
    f32 = jnp.float32
    gamma_p = jnp.pad(gamma.astype(f32), (0, dm_pad - d_model)).reshape(1, dm_pad)
    beta_p = jnp.pad(beta.astype(f32), (0, dm_pad - d_model)).reshape(1, dm_pad)
    w1_p = jnp.pad(w1.astype(f32), ((0, dm_pad - d_model), (0, di_pad - d_inner))
                   ).astype(jnp.bfloat16)
    b1_p = jnp.pad(b1.astype(f32), (0, di_pad - d_inner)).reshape(1, di_pad)
    w2_p = jnp.pad(w2.astype(f32), ((0, di_pad - d_inner), (0, dm_pad - d_model))
                   ).astype(jnp.bfloat16)
    b2_p = jnp.pad(b2.astype(f32), (0, dm_pad - d_model)).reshape(1, dm_pad)
    return dict(d_model=d_model, d_inner=d_inner, dm_pad=dm_pad, di_pad=di_pad,
                gamma=gamma_p, beta=beta_p, w1=w1_p, b1=b1_p, w2=w2_p, b2=b2_p)


def position_wise_fc_network(sequences, params, *, tm=512, eps=1e-5, force_inner_tile=None):
    """sequences: (N, L, d_model); params from pack_ffn_params. Returns (N, L, d_model)."""
    N, L, d_model = sequences.shape
    assert d_model == params["d_model"]
    d_inner, dm_pad, di_pad = params["d_inner"], params["dm_pad"], params["di_pad"]
    M = N * L
    itemsize = jnp.dtype(sequences.dtype).itemsize

    vmem_cap, num_cores = _tpu_caps()

    # Row tile: big by default (amortize ~0.35us/step); tiny inputs get a single full-M
    # tile on 1-TC chips, or are split across TCs when a multi-core chip is detected.
    if M >= num_cores * tm:
        tm_eff = tm
    elif num_cores > 1:
        tm_eff = max(8, _round_up(pl.cdiv(M, num_cores), 8))
    else:
        tm_eff = max(8, _round_up(M, 8))
    n_rows = pl.cdiv(M, tm_eff)

    def vmem_need(tile_inner, wbuf, streaming):
        n = 2 * tm_eff * dm_pad * itemsize                    # x tile (2 pipeline bufs)
        n += 2 * tm_eff * dm_pad * itemsize                   # out tile (2 pipeline bufs)
        n += (dm_pad * tile_inner + tile_inner * dm_pad) * 2 * wbuf   # bf16 W1/W2 blocks
        n += 4 * (3 * dm_pad + tile_inner) * wbuf             # gamma/beta/b2 + b1 (f32)
        n += tm_eff * tile_inner * (4 + 2)                    # fc1 f32 result + bf16 copy
        n += tm_eff * dm_pad * 4                              # f32 y / residual temp
        if streaming:
            n += tm_eff * dm_pad * (2 + 4)                    # xn bf16 + acc f32 scratch
        return n

    budget = int(vmem_cap * 0.5)
    if force_inner_tile is not None:
        tile_inner = max(128, min(_round_up(int(force_inner_tile), 128), di_pad))
        while di_pad % tile_inner:
            tile_inner += 128
    elif vmem_need(di_pad, 1, streaming=False) <= budget:
        tile_inner = di_pad                                   # weights fully resident
    else:
        tile_inner = 128                                      # stream d_inner in chunks
        t = di_pad - 128
        while t >= 256:
            if di_pad % t == 0 and vmem_need(t, 2, streaming=True) <= budget:
                tile_inner = t
                break
            t -= 128
    n_inner = di_pad // tile_inner
    single_inner = n_inner == 1

    # Generation-aware VMEM limit: never below the estimated need, never above ~3/4 cap.
    need = vmem_need(tile_inner, 2, streaming=not single_inner)
    vmem_limit = min(max(2 * need + (8 << 20), 32 << 20), vmem_cap * 3 // 4)
    vmem_limit = max(vmem_limit, need + (4 << 20))
    vmem_limit = int(min(vmem_limit, int(vmem_cap * 0.9)))

    # Activations: lane pad only (no row pad / no post-slice of rows).
    x2d = sequences.reshape(M, d_model)
    if dm_pad != d_model:
        x2d = jnp.pad(x2d, ((0, 0), (0, dm_pad - d_model)))

    scratch_shapes = []
    if not single_inner:
        scratch_shapes = [pltpu.VMEM((tm_eff, dm_pad), jnp.bfloat16),
                          pltpu.VMEM((tm_eff, dm_pad), jnp.float32)]

    bytes_accessed = int(2 * M * dm_pad * itemsize
                         + (params["w1"].size + params["w2"].size) * 2
                         + (params["gamma"].size + params["beta"].size
                            + params["b1"].size + params["b2"].size) * 4)

    kernel = functools.partial(ffn_kernel, d_model=d_model, eps=eps,
                               single_inner=single_inner)

    def _run(single_buffer_consts):
        const_mode = pl.Buffered(1) if single_buffer_consts else None
        w_mode = const_mode if single_inner else None
        grid_spec = pltpu.PrefetchScalarGridSpec(
            num_scalar_prefetch=0,
            grid=(n_rows, n_inner),
            in_specs=[
                pl.BlockSpec((tm_eff, dm_pad), lambda i, k: (i, 0)),                       # x
                pl.BlockSpec((1, dm_pad), lambda i, k: (0, 0), pipeline_mode=const_mode),  # gamma
                pl.BlockSpec((1, dm_pad), lambda i, k: (0, 0), pipeline_mode=const_mode),  # beta
                pl.BlockSpec((dm_pad, tile_inner), lambda i, k: (0, k), pipeline_mode=w_mode),  # W1
                pl.BlockSpec((1, tile_inner), lambda i, k: (0, k), pipeline_mode=w_mode),       # b1
                pl.BlockSpec((tile_inner, dm_pad), lambda i, k: (k, 0), pipeline_mode=w_mode),  # W2
                pl.BlockSpec((1, dm_pad), lambda i, k: (0, 0), pipeline_mode=const_mode),       # b2
            ],
            out_specs=pl.BlockSpec((tm_eff, dm_pad), lambda i, k: (i, 0)),
            scratch_shapes=scratch_shapes,
        )
        return pl.pallas_call(
            kernel,
            out_shape=jax.ShapeDtypeStruct((M, dm_pad), sequences.dtype),
            grid_spec=grid_spec,
            compiler_params=pltpu.CompilerParams(
                dimension_semantics=("parallel", "arbitrary"),
                vmem_limit_bytes=vmem_limit,
            ),
            cost_estimate=pl.CostEstimate(
                flops=int(4 * M * dm_pad * di_pad),
                transcendentals=int(M),
                bytes_accessed=bytes_accessed,
            ),
        )(x2d, params["gamma"], params["beta"], params["w1"], params["b1"],
          params["w2"], params["b2"])

    try:
        out2d = _run(True)
    except Exception:
        # pl.Buffered(1) not supported by this jax/libtpu -> fall back to default buffering.
        out2d = _run(False)

    if dm_pad != d_model:
        out2d = out2d[:, :d_model]
    return out2d.reshape(N, L, d_model)


def init_params(key, d_model, d_inner):
    """Deterministic parameter init mirroring nn.LayerNorm / nn.Linear defaults."""
    k1, k2, k3, k4 = jax.random.split(key, 4)
    gamma = jnp.ones((d_model,), jnp.float32)
    beta = jnp.zeros((d_model,), jnp.float32)
    bound1 = 1.0 / math.sqrt(d_model)
    w1 = jax.random.uniform(k1, (d_model, d_inner), jnp.float32, -bound1, bound1)
    b1 = jax.random.uniform(k2, (d_inner,), jnp.float32, -bound1, bound1)
    bound2 = 1.0 / math.sqrt(d_inner)
    w2 = jax.random.uniform(k3, (d_inner, d_model), jnp.float32, -bound2, bound2)
    b2 = jax.random.uniform(k4, (d_model,), jnp.float32, -bound2, bound2)
    return gamma, beta, w1, b1, w2, b2


def reference_forward(x, gamma, beta, w1, b1, w2, b2):
    mean = jnp.mean(x, axis=-1, keepdims=True)
    var = jnp.mean((x - mean) ** 2, axis=-1, keepdims=True)
    xn = (x - mean) * lax.rsqrt(var + 1e-5) * gamma + beta
    h = jnp.maximum(xn @ w1 + b1, 0.0)
    return h @ w2 + b2 + x


if __name__ == "__main__":
    key = jax.random.PRNGKey(0)
    k_x, k_p, k_x2, k_p2 = jax.random.split(key, 4)

    # Test 1: module-typical small shapes (resident-weight / single inner step path).
    N, L, d_model, d_inner = 2, 8, 32, 64
    x = jax.random.normal(k_x, (N, L, d_model), jnp.float32)
    p = init_params(k_p, d_model, d_inner)
    packed = pack_ffn_params(*p)
    out = jax.block_until_ready(position_wise_fc_network(x, packed))
    ref = reference_forward(x, *p)
    assert out.shape == (N, L, d_model)
    # bf16 MXU operands -> loosened tolerance vs the f32 reference.
    assert jnp.allclose(out, ref, atol=5e-2, rtol=5e-2), "mismatch (resident path)"

    # Test 2: force the d_inner-streaming accumulator path (2 inner grid steps).
    N2, L2, d_model2, d_inner2 = 2, 16, 128, 512
    x2 = jax.random.normal(k_x2, (N2, L2, d_model2), jnp.float32)
    p2 = init_params(k_p2, d_model2, d_inner2)
    packed2 = pack_ffn_params(*p2)
    out2 = jax.block_until_ready(
        position_wise_fc_network(x2, packed2, force_inner_tile=256))
    ref2 = reference_forward(x2, *p2)
    assert out2.shape == (N2, L2, d_model2)
    assert jnp.allclose(out2, ref2, atol=5e-2, rtol=5e-2), "mismatch (streaming path)"

    print("KERNEL_OK")
</pallas_src>

<mosaic_0001>
module attributes {stable_mosaic.version = 11 : i64} {
  func.func @ffn_kernel(%arg0: i32, %arg1: i32, %arg2: memref<16x128xf32, #tpu.memory_space<vmem>>, %arg3: memref<1x128xf32, #tpu.memory_space<vmem>>, %arg4: memref<1x128xf32, #tpu.memory_space<vmem>>, %arg5: memref<128x128xbf16, #tpu.memory_space<vmem>>, %arg6: memref<1x128xf32, #tpu.memory_space<vmem>>, %arg7: memref<128x128xbf16, #tpu.memory_space<vmem>>, %arg8: memref<1x128xf32, #tpu.memory_space<vmem>>, %arg9: memref<16x128xf32, #tpu.memory_space<vmem>>) attributes {dimension_semantics = [#tpu.dimension_semantics<parallel>, #tpu.dimension_semantics<arbitrary>], iteration_bounds = array<i64: 1, 1>, scalar_prefetch = 0 : i64, scratch_operands = 0 : i64, tpu.core_type = #tpu.core_type<tc>, window_params = [{transform_indices = @transform_0, window_bounds = array<i64: 16, 128>}, {pipeline_mode = #tpu.pipeline_mode<synchronous>, transform_indices = @transform_1, window_bounds = array<i64: 1, 128>}, {pipeline_mode = #tpu.pipeline_mode<synchronous>, transform_indices = @transform_2, window_bounds = array<i64: 1, 128>}, {pipeline_mode = #tpu.pipeline_mode<synchronous>, transform_indices = @transform_3, window_bounds = array<i64: 128, 128>}, {pipeline_mode = #tpu.pipeline_mode<synchronous>, transform_indices = @transform_4, window_bounds = array<i64: 1, 128>}, {pipeline_mode = #tpu.pipeline_mode<synchronous>, transform_indices = @transform_5, window_bounds = array<i64: 128, 128>}, {pipeline_mode = #tpu.pipeline_mode<synchronous>, transform_indices = @transform_6, window_bounds = array<i64: 1, 128>}, {transform_indices = @transform_7, window_bounds = array<i64: 16, 128>}]} {
    %c0 = arith.constant 0 : index
    %c0_0 = arith.constant 0 : index
    %0 = vector.load %arg2[%c0, %c0_0] : memref<16x128xf32, #tpu.memory_space<vmem>>, vector<16x128xf32>
    %cst = arith.constant dense<0.000000e+00> : vector<16xf32>
    %1 = vector.multi_reduction <add>, %0, %cst [1] : vector<16x128xf32> to vector<16xf32>
    %2 = vector.shape_cast %1 : vector<16xf32> to vector<16x1xf32>
    %cst_1 = arith.constant 3.125000e-02 : f32
    %3 = vector.broadcast %cst_1 : f32 to vector<16x1xf32>
    %4 = arith.mulf %2, %3 : vector<16x1xf32>
    %5 = vector.broadcast %4 : vector<16x1xf32> to vector<16x128xf32>
    %6 = arith.subf %0, %5 : vector<16x128xf32>
    %7 = tpu.iota {dimensions = array<i32: 1>} : vector<1x128xi32>
    %c32_i32 = arith.constant 32 : i32
    %8 = vector.broadcast %c32_i32 : i32 to vector<1x128xi32>
    %9 = arith.cmpi slt, %7, %8 : vector<1x128xi32>
    %cst_2 = arith.constant 0.000000e+00 : f32
    %10 = vector.shape_cast %9 : vector<1x128xi1> to vector<1x128xi1>
    %11 = vector.broadcast %10 : vector<1x128xi1> to vector<16x128xi1>
    %12 = vector.broadcast %cst_2 : f32 to vector<16x128xf32>
    %13 = arith.select %11, %6, %12 : vector<16x128xi1>, vector<16x128xf32>
    %14 = arith.mulf %13, %13 : vector<16x128xf32>
    %cst_3 = arith.constant dense<0.000000e+00> : vector<16xf32>
    %15 = vector.multi_reduction <add>, %14, %cst_3 [1] : vector<16x128xf32> to vector<16xf32>
    %16 = vector.shape_cast %15 : vector<16xf32> to vector<16x1xf32>
    %cst_4 = arith.constant 3.125000e-02 : f32
    %17 = vector.broadcast %cst_4 : f32 to vector<16x1xf32>
    %18 = arith.mulf %16, %17 : vector<16x1xf32>
    %cst_5 = arith.constant 9.99999974E-6 : f32
    %19 = vector.broadcast %cst_5 : f32 to vector<16x1xf32>
    %20 = arith.addf %18, %19 : vector<16x1xf32>
    %21 = math.rsqrt %20 : vector<16x1xf32>
    %22 = vector.broadcast %21 : vector<16x1xf32> to vector<16x128xf32>
    %23 = arith.mulf %13, %22 : vector<16x128xf32>
    %c0_6 = arith.constant 0 : index
    %c0_7 = arith.constant 0 : index
    %24 = vector.load %arg3[%c0_6, %c0_7] : memref<1x128xf32, #tpu.memory_space<vmem>>, vector<1x128xf32>
    %25 = vector.broadcast %24 : vector<1x128xf32> to vector<16x128xf32>
    %26 = arith.mulf %23, %25 : vector<16x128xf32>
    %c0_8 = arith.constant 0 : index
    %c0_9 = arith.constant 0 : index
    %27 = vector.load %arg4[%c0_8, %c0_9] : memref<1x128xf32, #tpu.memory_space<vmem>>, vector<1x128xf32>
    %28 = vector.broadcast %27 : vector<1x128xf32> to vector<16x128xf32>
    %29 = arith.addf %26, %28 : vector<16x128xf32>
    %30 = arith.truncf %29 : vector<16x128xf32> to vector<16x128xbf16>
    %c0_10 = arith.constant 0 : index
    %c0_11 = arith.constant 0 : index
    %31 = vector.load %arg5[%c0_10, %c0_11] : memref<128x128xbf16, #tpu.memory_space<vmem>>, vector<128x128xbf16>
    %cst_12 = arith.constant dense<0.000000e+00> : vector<16x128xf32>
    %32 = tpu.matmul %30, %31, %cst_12 {dimension_numbers = #tpu.dot_dimension_numbers<[1], [0], [0], [1], [0, 0, 1, 1], [], []>} : vector<16x128xbf16>, vector<128x128xbf16>, vector<16x128xf32> -> vector<16x128xf32>
    %c0_13 = arith.constant 0 : index
    %c0_14 = arith.constant 0 : index
    %33 = vector.load %arg6[%c0_13, %c0_14] : memref<1x128xf32, #tpu.memory_space<vmem>>, vector<1x128xf32>
    %34 = vector.broadcast %33 : vector<1x128xf32> to vector<16x128xf32>
    %35 = arith.addf %32, %34 : vector<16x128xf32>
    %cst_15 = arith.constant 0.000000e+00 : f32
    %36 = vector.broadcast %cst_15 : f32 to vector<16x128xf32>
    %37 = arith.maximumf %35, %36 : vector<16x128xf32>
    %38 = arith.truncf %37 : vector<16x128xf32> to vector<16x128xbf16>
    %c0_16 = arith.constant 0 : index
    %c0_17 = arith.constant 0 : index
    %39 = vector.load %arg7[%c0_16, %c0_17] : memref<128x128xbf16, #tpu.memory_space<vmem>>, vector<128x128xbf16>
    %cst_18 = arith.constant dense<0.000000e+00> : vector<16x128xf32>
    %40 = tpu.matmul %38, %39, %cst_18 {dimension_numbers = #tpu.dot_dimension_numbers<[1], [0], [0], [1], [0, 0, 1, 1], [], []>} : vector<16x128xbf16>, vector<128x128xbf16>, vector<16x128xf32> -> vector<16x128xf32>
    %c0_19 = arith.constant 0 : index
    %c0_20 = arith.constant 0 : index
    %41 = vector.load %arg8[%c0_19, %c0_20] : memref<1x128xf32, #tpu.memory_space<vmem>>, vector<1x128xf32>
    %42 = vector.broadcast %41 : vector<1x128xf32> to vector<16x128xf32>
    %43 = arith.addf %40, %42 : vector<16x128xf32>
    %c0_21 = arith.constant 0 : index
    %c0_22 = arith.constant 0 : index
    %44 = vector.load %arg2[%c0_21, %c0_22] : memref<16x128xf32, #tpu.memory_space<vmem>>, vector<16x128xf32>
    %45 = arith.addf %43, %44 : vector<16x128xf32>
    %c0_23 = arith.constant 0 : index
    %c0_24 = arith.constant 0 : index
    %46 = vector.load %arg9[%c0_23, %c0_24] : memref<16x128xf32, #tpu.memory_space<vmem>>, vector<16x128xf32>
    tpu.vector_store %arg9[%c0_23, %c0_24], %45 {strides = array<i32>} : memref<16x128xf32, #tpu.memory_space<vmem>>, vector<16x128xf32>,
    return
  }
  func.func @transform_0(%arg0: i32, %arg1: i32) -> (i32, i32) {
    %c0_i32 = arith.constant 0 : i32
    %c0_i32_0 = arith.constant 0 : i32
    return %arg0, %c0_i32 : i32, i32
  }
  func.func @transform_1(%arg0: i32, %arg1: i32) -> (i32, i32) {
    %c0_i32 = arith.constant 0 : i32
    %c0_i32_0 = arith.constant 0 : i32
    %c0_i32_1 = arith.constant 0 : i32
    return %c0_i32, %c0_i32_0 : i32, i32
  }
  func.func @transform_2(%arg0: i32, %arg1: i32) -> (i32, i32) {
    %c0_i32 = arith.constant 0 : i32
    %c0_i32_0 = arith.constant 0 : i32
    %c0_i32_1 = arith.constant 0 : i32
    return %c0_i32, %c0_i32_0 : i32, i32
  }
  func.func @transform_3(%arg0: i32, %arg1: i32) -> (i32, i32) {
    %c0_i32 = arith.constant 0 : i32
    %c0_i32_0 = arith.constant 0 : i32
    return %c0_i32, %arg1 : i32, i32
  }
  func.func @transform_4(%arg0: i32, %arg1: i32) -> (i32, i32) {
    %c0_i32 = arith.constant 0 : i32
    %c0_i32_0 = arith.constant 0 : i32
    return %c0_i32, %arg1 : i32, i32
  }
  func.func @transform_5(%arg0: i32, %arg1: i32) -> (i32, i32) {
    %c0_i32 = arith.constant 0 : i32
    %c0_i32_0 = arith.constant 0 : i32
    return %arg1, %c0_i32 : i32, i32
  }
  func.func @transform_6(%arg0: i32, %arg1: i32) -> (i32, i32) {
    %c0_i32 = arith.constant 0 : i32
    %c0_i32_0 = arith.constant 0 : i32
    %c0_i32_1 = arith.constant 0 : i32
    return %c0_i32, %c0_i32_0 : i32, i32
  }
  func.func @transform_7(%arg0: i32, %arg1: i32) -> (i32, i32) {
    %c0_i32 = arith.constant 0 : i32
    %c0_i32_0 = arith.constant 0 : i32
    return %arg0, %c0_i32 : i32, i32
  }
}

module attributes {stable_mosaic.version = 11 : i64} {
  func.func @ffn_kernel(%arg0: i32, %arg1: i32, %arg2: memref<16x128xf32, #tpu.memory_space<vmem>>, %arg3: memref<1x128xf32, #tpu.memory_space<vmem>>, %arg4: memref<1x128xf32, #tpu.memory_space<vmem>>, %arg5: memref<128x128xbf16, #tpu.memory_space<vmem>>, %arg6: memref<1x128xf32, #tpu.memory_space<vmem>>, %arg7: memref<128x128xbf16, #tpu.memory_space<vmem>>, %arg8: memref<1x128xf32, #tpu.memory_space<vmem>>, %arg9: memref<16x128xf32, #tpu.memory_space<vmem>>) attributes {dimension_semantics = [#tpu.dimension_semantics<parallel>, #tpu.dimension_semantics<arbitrary>], iteration_bounds = array<i64: 1, 1>, scalar_prefetch = 0 : i64, scratch_operands = 0 : i64, tpu.core_type = #tpu.core_type<tc>, window_params = [{transform_indices = @transform_0, window_bounds = array<i64: 16, 128>}, {pipeline_mode = #tpu.pipeline_mode<synchronous>, transform_indices = @transform_1, window_bounds = array<i64: 1, 128>}, {pipeline_mode = #tpu.pipeline_mode<synchronous>, transform_indices = @transform_2, window_bounds = array<i64: 1, 128>}, {transform_indices = @transform_3, window_bounds = array<i64: 128, 128>}, {transform_indices = @transform_4, window_bounds = array<i64: 1, 128>}, {transform_indices = @transform_5, window_bounds = array<i64: 128, 128>}, {pipeline_mode = #tpu.pipeline_mode<synchronous>, transform_indices = @transform_6, window_bounds = array<i64: 1, 128>}, {transform_indices = @transform_7, window_bounds = array<i64: 16, 128>}]} {
    %c0 = arith.constant 0 : index
    %c0_0 = arith.constant 0 : index
    %0 = vector.load %arg2[%c0, %c0_0] : memref<16x128xf32, #tpu.memory_space<vmem>>, vector<16x128xf32>
    %cst = arith.constant dense<0.000000e+00> : vector<16xf32>
    %1 = vector.multi_reduction <add>, %0, %cst [1] : vector<16x128xf32> to vector<16xf32>
    %2 = vector.shape_cast %1 : vector<16xf32> to vector<16x1xf32>
    %cst_1 = arith.constant 3.125000e-02 : f32
    %3 = vector.broadcast %cst_1 : f32 to vector<16x1xf32>
    %4 = arith.mulf %2, %3 : vector<16x1xf32>
    %5 = vector.broadcast %4 : vector<16x1xf32> to vector<16x128xf32>
    %6 = arith.subf %0, %5 : vector<16x128xf32>
    %7 = tpu.iota {dimensions = array<i32: 1>} : vector<1x128xi32>
    %c32_i32 = arith.constant 32 : i32
    %8 = vector.broadcast %c32_i32 : i32 to vector<1x128xi32>
    %9 = arith.cmpi slt, %7, %8 : vector<1x128xi32>
    %cst_2 = arith.constant 0.000000e+00 : f32
    %10 = vector.shape_cast %9 : vector<1x128xi1> to vector<1x128xi1>
    %11 = vector.broadcast %10 : vector<1x128xi1> to vector<16x128xi1>
    %12 = vector.broadcast %cst_2 : f32 to vector<16x128xf32>
    %13 = arith.select %11, %6, %12 : vector<16x128xi1>, vector<16x128xf32>
    %14 = arith.mulf %13, %13 : vector<16x128xf32>
    %cst_3 = arith.constant dense<0.000000e+00> : vector<16xf32>
    %15 = vector.multi_reduction <add>, %14, %cst_3 [1] : vector<16x128xf32> to vector<16xf32>
    %16 = vector.shape_cast %15 : vector<16xf32> to vector<16x1xf32>
    %cst_4 = arith.constant 3.125000e-02 : f32
    %17 = vector.broadcast %cst_4 : f32 to vector<16x1xf32>
    %18 = arith.mulf %16, %17 : vector<16x1xf32>
    %cst_5 = arith.constant 9.99999974E-6 : f32
    %19 = vector.broadcast %cst_5 : f32 to vector<16x1xf32>
    %20 = arith.addf %18, %19 : vector<16x1xf32>
    %21 = math.rsqrt %20 : vector<16x1xf32>
    %22 = vector.broadcast %21 : vector<16x1xf32> to vector<16x128xf32>
    %23 = arith.mulf %13, %22 : vector<16x128xf32>
    %c0_6 = arith.constant 0 : index
    %c0_7 = arith.constant 0 : index
    %24 = vector.load %arg3[%c0_6, %c0_7] : memref<1x128xf32, #tpu.memory_space<vmem>>, vector<1x128xf32>
    %25 = vector.broadcast %24 : vector<1x128xf32> to vector<16x128xf32>
    %26 = arith.mulf %23, %25 : vector<16x128xf32>
    %c0_8 = arith.constant 0 : index
    %c0_9 = arith.constant 0 : index
    %27 = vector.load %arg4[%c0_8, %c0_9] : memref<1x128xf32, #tpu.memory_space<vmem>>, vector<1x128xf32>
    %28 = vector.broadcast %27 : vector<1x128xf32> to vector<16x128xf32>
    %29 = arith.addf %26, %28 : vector<16x128xf32>
    %30 = arith.truncf %29 : vector<16x128xf32> to vector<16x128xbf16>
    %c0_10 = arith.constant 0 : index
    %c0_11 = arith.constant 0 : index
    %31 = vector.load %arg5[%c0_10, %c0_11] : memref<128x128xbf16, #tpu.memory_space<vmem>>, vector<128x128xbf16>
    %cst_12 = arith.constant dense<0.000000e+00> : vector<16x128xf32>
    %32 = tpu.matmul %30, %31, %cst_12 {dimension_numbers = #tpu.dot_dimension_numbers<[1], [0], [0], [1], [0, 0, 1, 1], [], []>} : vector<16x128xbf16>, vector<128x128xbf16>, vector<16x128xf32> -> vector<16x128xf32>
    %c0_13 = arith.constant 0 : index
    %c0_14 = arith.constant 0 : index
    %33 = vector.load %arg6[%c0_13, %c0_14] : memref<1x128xf32, #tpu.memory_space<vmem>>, vector<1x128xf32>
    %34 = vector.broadcast %33 : vector<1x128xf32> to vector<16x128xf32>
    %35 = arith.addf %32, %34 : vector<16x128xf32>
    %cst_15 = arith.constant 0.000000e+00 : f32
    %36 = vector.broadcast %cst_15 : f32 to vector<16x128xf32>
    %37 = arith.maximumf %35, %36 : vector<16x128xf32>
    %38 = arith.truncf %37 : vector<16x128xf32> to vector<16x128xbf16>
    %c0_16 = arith.constant 0 : index
    %c0_17 = arith.constant 0 : index
    %39 = vector.load %arg7[%c0_16, %c0_17] : memref<128x128xbf16, #tpu.memory_space<vmem>>, vector<128x128xbf16>
    %cst_18 = arith.constant dense<0.000000e+00> : vector<16x128xf32>
    %40 = tpu.matmul %38, %39, %cst_18 {dimension_numbers = #tpu.dot_dimension_numbers<[1], [0], [0], [1], [0, 0, 1, 1], [], []>} : vector<16x128xbf16>, vector<128x128xbf16>, vector<16x128xf32> -> vector<16x128xf32>
    %c0_19 = arith.constant 0 : index
    %c0_20 = arith.constant 0 : index
    %41 = vector.load %arg8[%c0_19, %c0_20] : memref<1x128xf32, #tpu.memory_space<vmem>>, vector<1x128xf32>
    %42 = vector.broadcast %41 : vector<1x128xf32> to vector<16x128xf32>
    %43 = arith.addf %40, %42 : vector<16x128xf32>
    %c0_21 = arith.constant 0 : index
    %c0_22 = arith.constant 0 : index
    %44 = vector.load %arg2[%c0_21, %c0_22] : memref<16x128xf32, #tpu.memory_space<vmem>>, vector<16x128xf32>
    %45 = arith.addf %43, %44 : vector<16x128xf32>
    %c0_23 = arith.constant 0 : index
    %c0_24 = arith.constant 0 : index
    %46 = vector.load %arg9[%c0_23, %c0_24] : memref<16x128xf32, #tpu.memory_space<vmem>>, vector<16x128xf32>
    tpu.vector_store %arg9[%c0_23, %c0_24], %45 {strides = array<i32>} : memref<16x128xf32, #tpu.memory_space<vmem>>, vector<16x128xf32>,
    return
  }
  func.func @transform_0(%arg0: i32, %arg1: i32) -> (i32, i32) {
    %c0_i32 = arith.constant 0 : i32
    %c0_i32_0 = arith.constant 0 : i32
    return %arg0, %c0_i32 : i32, i32
  }
  func.func @transform_1(%arg0: i32, %arg1: i32) -> (i32, i32) {
    %c0_i32 = arith.constant 0 : i32
    %c0_i32_0 = arith.constant 0 : i32
    %c0_i32_1 = arith.constant 0 : i32
    return %c0_i32, %c0_i32_0 : i32, i32
  }
  func.func @transform_2(%arg0: i32, %arg1: i32) -> (i32, i32) {
    %c0_i32 = arith.constant 0 : i32
    %c0_i32_0 = arith.constant 0 : i32
    %c0_i32_1 = arith.constant 0 : i32
    return %c0_i32, %c0_i32_0 : i32, i32
  }
  func.func @transform_3(%arg0: i32, %arg1: i32) -> (i32, i32) {
    %c0_i32 = arith.constant 0 : i32
    %c0_i32_0 = arith.constant 0 : i32
    return %c0_i32, %arg1 : i32, i32
  }
  func.func @transform_4(%arg0: i32, %arg1: i32) -> (i32, i32) {
    %c0_i32 = arith.constant 0 : i32
    %c0_i32_0 = arith.constant 0 : i32
    return %c0_i32, %arg1 : i32, i32
  }
  func.func @transform_5(%arg0: i32, %arg1: i32) -> (i32, i32) {
    %c0_i32 = arith.constant 0 : i32
    %c0_i32_0 = arith.constant 0 : i32
    return %arg1, %c0_i32 : i32, i32
  }
  func.func @transform_6(%arg0: i32, %arg1: i32) -> (i32, i32) {
    %c0_i32 = arith.constant 0 : i32
    %c0_i32_0 = arith.constant 0 : i32
    %c0_i32_1 = arith.constant 0 : i32
    return %c0_i32, %c0_i32_0 : i32, i32
  }
  func.func @transform_7(%arg0: i32, %arg1: i32) -> (i32, i32) {
    %c0_i32 = arith.constant 0 : i32
    %c0_i32_0 = arith.constant 0 : i32
    return %arg0, %c0_i32 : i32, i32
  }
}

</mosaic_0001>

<llo_original>
// kernel: tpu_custom_call.1
$region0: #{tpu_custom_call.1}
  #allocation0 [shape = 'u32[]', space=smem, size = 0x4, offset = 0x4, fixed_abs, tag = 'smem constant byte address 0x4 - core index']
  #allocation1 [shape = 'u32[144,128]{1,0:T(1,128)}', space=vmem, size = 0x12000, scoped, tag = 'internal scratch']
  %s0 = inlined_call_operand.hbm [shape: f32[16,128], index: 0, kind: input, shape index: {}]
  %s1 = inlined_call_operand.vmem [shape: f32[1,128], index: 1, kind: input, shape index: {}]
  %s2 = inlined_call_operand.vmem [shape: f32[1,128], index: 2, kind: input, shape index: {}]
  %s3 = inlined_call_operand.hbm [shape: bf16[128,128], index: 3, kind: input, shape index: {}]
  %s4 = inlined_call_operand.vmem [shape: f32[1,128], index: 4, kind: input, shape index: {}]
  %s5 = inlined_call_operand.hbm [shape: bf16[128,128], index: 5, kind: input, shape index: {}]
  %s6 = inlined_call_operand.vmem [shape: f32[1,128], index: 6, kind: input, shape index: {}]
  %s7 = inlined_call_operand.hbm [shape: f32[16,128], index: 7, kind: output, shape index: {}]
  %s8 = sld [smem:[#allocation0]]
  $region50: #{tpu_custom_call.1} parent=0
    _
  %s10 = ssub.s32 1, %s8
  %s11 = scalar_select 0, %s10, %s8
  $region1: #{tpu_custom_call.1} parent=0
    #allocation2 [shape = 'u8[8192]{0}', space=vmem, size = 0x2000, scoped, tag = 'input window, operand 0, single buffered']
    #allocation3 [shape = 's32[1]{0}', space=sflag, size = 0x4, scoped, tag = 'scoped memory for tpu_custom_call.1']
    #allocation4 [shape = 's32[1]{0}', space=sflag, size = 0x4, scoped, tag = 'scoped memory for tpu_custom_call.1']
    #allocation5 [shape = 'u8[32768]{0}', space=vmem, size = 0x8000, scoped, tag = 'input window, operand 3, single buffered']
    #allocation6 [shape = 's32[1]{0}', space=sflag, size = 0x4, scoped, tag = 'scoped memory for tpu_custom_call.1']
    #allocation7 [shape = 'u8[32768]{0}', space=vmem, size = 0x8000, scoped, tag = 'input window, operand 5, single buffered']
    #allocation8 [shape = 'u8[8192]{0}', space=vmem, size = 0x2000, scoped, tag = 'output window, operand 0, single buffered']
    %12 = vsyncpa [#allocation3], 0
    %13 = vsyncpa [#allocation6], 0
    %14 = vsyncpa [#allocation4], 0
    // Predicated region
    $region2: #{tpu_custom_call.1} parent=1 // pred_check
      _
    $region3: #{tpu_custom_call.1} parent=1 // pred_check_branch
      %16 = sbr.rel (0) target = $region5
    $region4: #{tpu_custom_call.1} parent=1 // pred_region
      %s18 = ssub.s32 256, 256
      %19 = vsyncadd [#allocation3], %s18
      %s20 = sshll.u32 [#allocation2], 4
      %s21 = int_to_ptr.vmem [resolvable:$true] %s20
      %26 = dma.hbm_to_vmem [thread:$0]  %s0, 256, %s21, [#allocation3], 128, 128, 8
    $region5: #{tpu_custom_call.1} parent=1 // pred_fallthru
      _
    // Predicated region
    $region6: #{tpu_custom_call.1} parent=1 // pred_check
      _
    $region7: #{tpu_custom_call.1} parent=1 // pred_check_branch
      %28 = sbr.rel (0) target = $region9
    $region8: #{tpu_custom_call.1} parent=1 // pred_region
      _
    $region9: #{tpu_custom_call.1} parent=1 // pred_fallthru
      _
    // Predicated region
    $region10: #{tpu_custom_call.1} parent=1 // pred_check
      _
    $region11: #{tpu_custom_call.1} parent=1 // pred_check_branch
      %30 = sbr.rel (0) target = $region13
    $region12: #{tpu_custom_call.1} parent=1 // pred_region
      _
    $region13: #{tpu_custom_call.1} parent=1 // pred_fallthru
      _
    // Predicated region
    $region14: #{tpu_custom_call.1} parent=1 // pred_check
      _
    $region15: #{tpu_custom_call.1} parent=1 // pred_check_branch
      %32 = sbr.rel (0) target = $region17
    $region16: #{tpu_custom_call.1} parent=1 // pred_region
      %s34 = ssub.s32 1024, 1024
      %35 = vsyncadd [#allocation6], %s34
      %s36 = sshll.u32 [#allocation5], 4
      %s37 = int_to_ptr.vmem [resolvable:$true] %s36
      %42 = dma.hbm_to_vmem [thread:$0]  %s3, 1024, %s37, [#allocation6], 64, 64, 4
    $region17: #{tpu_custom_call.1} parent=1 // pred_fallthru
      _
    // Predicated region
    $region18: #{tpu_custom_call.1} parent=1 // pred_check
      _
    $region19: #{tpu_custom_call.1} parent=1 // pred_check_branch
      %44 = sbr.rel (0) target = $region21
    $region20: #{tpu_custom_call.1} parent=1 // pred_region
      _
    $region21: #{tpu_custom_call.1} parent=1 // pred_fallthru
      _
    // Predicated region
    $region22: #{tpu_custom_call.1} parent=1 // pred_check
      _
    $region23: #{tpu_custom_call.1} parent=1 // pred_check_branch
      %46 = sbr.rel (0) target = $region25
    $region24: #{tpu_custom_call.1} parent=1 // pred_region
      %s48 = ssub.s32 1024, 1024
      %49 = vsyncadd [#allocation6], %s48
      %s50 = sshll.u32 [#allocation7], 4
      %s51 = int_to_ptr.vmem [resolvable:$true] %s50
      %56 = dma.hbm_to_vmem [thread:$0]  %s5, 1024, %s51, [#allocation6], 64, 64, 4
    $region25: #{tpu_custom_call.1} parent=1 // pred_fallthru
      _
    // Predicated region
    $region26: #{tpu_custom_call.1} parent=1 // pred_check
      _
    $region27: #{tpu_custom_call.1} parent=1 // pred_check_branch
      %58 = sbr.rel (0) target = $region29
    $region28: #{tpu_custom_call.1} parent=1 // pred_region
      _
    $region29: #{tpu_custom_call.1} parent=1 // pred_fallthru
      _
    // Predicated region
    $region30: #{tpu_custom_call.1} parent=1 // pred_check
      _
    $region31: #{tpu_custom_call.1} parent=1 // pred_check_branch
      %60 = sbr.rel (0) target = $region33
    $region32: #{tpu_custom_call.1} parent=1 // pred_region
      %61 = dma.done [#allocation3], 256
    $region33: #{tpu_custom_call.1} parent=1 // pred_fallthru
      _
    // Predicated region
    $region34: #{tpu_custom_call.1} parent=1 // pred_check
      _
    $region35: #{tpu_custom_call.1} parent=1 // pred_check_branch
      %63 = sbr.rel (0) target = $region37
    $region36: #{tpu_custom_call.1} parent=1 // pred_region
      %64 = dma.done [#allocation6], 1024
    $region37: #{tpu_custom_call.1} parent=1 // pred_fallthru
      _
    // Predicated region
    $region38: #{tpu_custom_call.1} parent=1 // pred_check
      _
    $region39: #{tpu_custom_call.1} parent=1 // pred_check_branch
      %66 = sbr.rel (0) target = $region41
    $region40: #{tpu_custom_call.1} parent=1 // pred_region
      %67 = dma.done [#allocation6], 1024
    $region41: #{tpu_custom_call.1} parent=1 // pred_fallthru
      _
    %v69 = vld [vmem:[#allocation2] sm:$0xff]
    %v70 = vld [vmem:[#allocation2 + $0x8] sm:$0xff]
    %71 = vadd.xlane.f32.xlu0 %v69
    %v72 = vpop.xlane.xlu0 %71
    %73 = vadd.xlane.f32.xlu0 %v70
    %v74 = vpop.xlane.xlu0 %73
    %v75 = vmul.f32 %v72, 0.03125
    %v76 = vmul.f32 %v74, 0.03125
    %v77 = vsub.f32 %v69, %v75
    %v78 = vsub.f32 %v70, %v76
    %v79 = vlaneseq
    %v80 = vand.u32 %v79, 127
    %vm81 = vcmp.lt.s32.totalorder %v80, 32
    %v82 = vsel %vm81, 1, 0
    %vm83 = vcmp.eq.s32.totalorder %v82, 1
    %v84 = vsel %vm83, %v77, 0.0
    %v85 = vsel %vm83, %v78, 0.0
    %v86 = vmul.f32 %v84, %v84
    %v87 = vmul.f32 %v85, %v85
    %88 = vadd.xlane.f32.xlu0 %v86
    %v89 = vpop.xlane.xlu0 %88
    %90 = vadd.xlane.f32.xlu0 %v87
    %v91 = vpop.xlane.xlu0 %90
    %v92 = vmul.f32 %v89, 0.03125
    %v93 = vmul.f32 %v91, 0.03125
    %v94 = vadd.f32 %v92, 1e-05
    %v95 = vadd.f32 %v93, 1e-05
    %v96 = vrsqrt.pop %v94
    %v97 = vrsqrt.pop %v95
    %v98 = vmul.f32 %v84, %v96
    %v99 = vmul.f32 %v85, %v97
    %v100 = vld [vmem:[%s1] sm:$0x1]
    %v102 = vlaneseq
    %v103 = vshrl.u32 %v102, 7
    %v104 = vsub.s32 0, %v103
    %v105 = vrot.slane %v100, %v104
    %v107 = vmul.f32 %v98, %v105
    %v108 = vmul.f32 %v99, %v105
    %v109 = vld [vmem:[%s2] sm:$0x1]
    %v111 = vlaneseq
    %v112 = vshrl.u32 %v111, 7
    %v113 = vsub.s32 0, %v112
    %v114 = vrot.slane %v109, %v113
    %v116 = vadd.f32 %v107, %v114
    %v117 = vadd.f32 %v108, %v114
    %v118 = vpack.c.bf16 %v117, %v116
    %v119 = vld [vmem:[#allocation5] sm:$0xf]
    %v120 = vld [vmem:[#allocation5 + $0x4] sm:$0xf]
    %v121 = vld [vmem:[#allocation5 + $0x8] sm:$0xf]
    %v122 = vld [vmem:[#allocation5 + $0xc] sm:$0xf]
    %v123 = vld [vmem:[#allocation5 + $0x10] sm:$0xf]
    %v124 = vld [vmem:[#allocation5 + $0x14] sm:$0xf]
    %v125 = vld [vmem:[#allocation5 + $0x18] sm:$0xf]
    %v126 = vld [vmem:[#allocation5 + $0x1c] sm:$0xf]
    %v127 = vld [vmem:[#allocation5 + $0x20] sm:$0xf]
    %v128 = vld [vmem:[#allocation5 + $0x24] sm:$0xf]
    %v129 = vld [vmem:[#allocation5 + $0x28] sm:$0xf]
    %v130 = vld [vmem:[#allocation5 + $0x2c] sm:$0xf]
    %v131 = vld [vmem:[#allocation5 + $0x30] sm:$0xf]
    %v132 = vld [vmem:[#allocation5 + $0x34] sm:$0xf]
    %v133 = vld [vmem:[#allocation5 + $0x38] sm:$0xf]
    %v134 = vld [vmem:[#allocation5 + $0x3c] sm:$0xf]
    %v135 = vld [vmem:[%s4] sm:$0x1]
    %v137 = vlaneseq
    %v138 = vshrl.u32 %v137, 7
    %v139 = vsub.s32 0, %v138
    %v140 = vrot.slane %v135, %v139
    %v158 = vunpack.c.l.b16 %v119
    %v159 = vunpack.c.l.b16 %v120
    %v160 = vunpack.c.l.b16 %v121
    %v161 = vunpack.c.l.b16 %v122
    %v162 = vunpack.c.l.b16 %v123
    %v163 = vunpack.c.l.b16 %v124
    %v164 = vunpack.c.l.b16 %v125
    %v165 = vunpack.c.l.b16 %v126
    %v166 = vunpack.c.l.b16 %v127
    %v167 = vunpack.c.l.b16 %v128
    %v168 = vunpack.c.l.b16 %v129
    %v169 = vunpack.c.l.b16 %v130
    %v170 = vunpack.c.l.b16 %v131
    %v171 = vunpack.c.l.b16 %v132
    %v172 = vunpack.c.l.b16 %v133
    %v173 = vunpack.c.l.b16 %v134
    %v174 = vpack.c.b16 %v159, %v158
    %v175 = vpack.c.b16 %v161, %v160
    %v176 = vpack.c.b16 %v163, %v162
    %v177 = vpack.c.b16 %v165, %v164
    %v178 = vpack.c.b16 %v167, %v166
    %v179 = vpack.c.b16 %v169, %v168
    %v180 = vpack.c.b16 %v171, %v170
    %v181 = vpack.c.b16 %v173, %v172
    %190 = vmatprep.subr.bf16.mxu0 0
    %191 = vmatpush1.bf16.msra.mxu0 %v181
    %192 = vmatprep.subr.bf16.mxu0 0
    %193 = vmatpush1.bf16.msra.mxu0 %v180
    %194 = vmatprep.subr.bf16.mxu0 0
    %195 = vmatpush1.bf16.msra.mxu0 %v179
    %196 = vmatprep.subr.bf16.mxu0 0
    %197 = vmatpush1.bf16.msra.mxu0 %v178
    %198 = vmatprep.subr.bf16.mxu0 0
    %199 = vmatpush1.bf16.msra.mxu0 %v177
    %200 = vmatprep.subr.bf16.mxu0 0
    %201 = vmatpush1.bf16.msra.mxu0 %v176
    %202 = vmatprep.subr.bf16.mxu0 0
    %203 = vmatpush1.bf16.msra.mxu0 %v175
    %204 = vmatprep.subr.bf16.mxu0 0
    %205 = vmatpush1.bf16.msra.mxu0 %v174
    %206 = vmatprep.subr.bf16.mxu0 0
    %207 = vmatpush2.bf16.msra.mxu0 0
    %208 = vmatprep.subr.bf16.mxu0 0
    %209 = vmatpush2.bf16.msra.mxu0 0
    %210 = vmatprep.subr.bf16.mxu0 0
    %211 = vmatpush2.bf16.msra.mxu0 0
    %212 = vmatprep.subr.bf16.mxu0 0
    %213 = vmatpush2.bf16.msra.mxu0 0
    %214 = vmatprep.subr.bf16.mxu0 0
    %215 = vmatpush2.bf16.msra.mxu0 0
    %216 = vmatprep.subr.bf16.mxu0 0
    %217 = vmatpush2.bf16.msra.mxu0 0
    %218 = vmatprep.subr.bf16.mxu0 0
    %219 = vmatpush2.bf16.msra.mxu0 0
    %220 = vmatprep.subr.bf16.mxu0 0
    %221 = vmatpush2.bf16.msra.mxu0 0
    %222 = vmatprep.mubr.bf16.mxu0 0
    %223 = vmatmul.mubr.bf16.gmra.mxu0 %v118
    %v224 = vpop.f32.mrf.mxu0
    %v225 = vadd.f32 %v140, %v224
    %v226 = vpop.f32.mrf.mxu0
    %v227 = vpop.f32.mrf.mxu0
    %v228 = vadd.f32 %v140, %v227
    %v229 = vpop.f32.mrf.mxu0
    %230 = vdwg.mxu0
    %v231 = vmax.f32 %v225, 0.0
    %v232 = vmax.f32 %v228, 0.0
    %v233 = vpack.c.bf16 %v232, %v231
    %v234 = vld [vmem:[#allocation7] sm:$0xf]
    %v235 = vld [vmem:[#allocation7 + $0x4] sm:$0xf]
    %v236 = vld [vmem:[#allocation7 + $0x8] sm:$0xf]
    %v237 = vld [vmem:[#allocation7 + $0xc] sm:$0xf]
    %v238 = vld [vmem:[#allocation7 + $0x10] sm:$0xf]
    %v239 = vld [vmem:[#allocation7 + $0x14] sm:$0xf]
    %v240 = vld [vmem:[#allocation7 + $0x18] sm:$0xf]
    %v241 = vld [vmem:[#allocation7 + $0x1c] sm:$0xf]
    %v242 = vld [vmem:[#allocation7 + $0x20] sm:$0xf]
    %v243 = vld [vmem:[#allocation7 + $0x24] sm:$0xf]
    %v244 = vld [vmem:[#allocation7 + $0x28] sm:$0xf]
    %v245 = vld [vmem:[#allocation7 + $0x2c] sm:$0xf]
    %v246 = vld [vmem:[#allocation7 + $0x30] sm:$0xf]
    %v247 = vld [vmem:[#allocation7 + $0x34] sm:$0xf]
    %v248 = vld [vmem:[#allocation7 + $0x38] sm:$0xf]
    %v249 = vld [vmem:[#allocation7 + $0x3c] sm:$0xf]
    %v250 = vld [vmem:[%s6] sm:$0x1]
    %v252 = vlaneseq
    %v253 = vshrl.u32 %v252, 7
    %v254 = vsub.s32 0, %v253
    %v255 = vrot.slane %v250, %v254
    %v273 = vunpack.c.l.b16 %v234
    %v274 = vunpack.c.l.b16 %v235
    %v275 = vunpack.c.l.b16 %v236
    %v276 = vunpack.c.l.b16 %v237
    %v277 = vunpack.c.l.b16 %v238
    %v278 = vunpack.c.l.b16 %v239
    %v279 = vunpack.c.l.b16 %v240
    %v280 = vunpack.c.l.b16 %v241
    %v281 = vunpack.c.l.b16 %v242
    %v282 = vunpack.c.l.b16 %v243
    %v283 = vunpack.c.l.b16 %v244
    %v284 = vunpack.c.l.b16 %v245
    %v285 = vunpack.c.l.b16 %v246
    %v286 = vunpack.c.l.b16 %v247
    %v287 = vunpack.c.l.b16 %v248
    %v288 = vunpack.c.l.b16 %v249
    %v289 = vpack.c.b16 %v274, %v273
    %v290 = vpack.c.b16 %v276, %v275
    %v291 = vpack.c.b16 %v278, %v277
    %v292 = vpack.c.b16 %v280, %v279
    %v293 = vpack.c.b16 %v282, %v281
    %v294 = vpack.c.b16 %v284, %v283
    %v295 = vpack.c.b16 %v286, %v285
    %v296 = vpack.c.b16 %v288, %v287
    %305 = vmatprep.subr.bf16.mxu0 0
    %306 = vmatpush1.bf16.msra.mxu0 %v296
    %307 = vmatprep.subr.bf16.mxu0 0
    %308 = vmatpush1.bf16.msra.mxu0 %v295
    %309 = vmatprep.subr.bf16.mxu0 0
    %310 = vmatpush1.bf16.msra.mxu0 %v294
    %311 = vmatprep.subr.bf16.mxu0 0
    %312 = vmatpush1.bf16.msra.mxu0 %v293
    %313 = vmatprep.subr.bf16.mxu0 0
    %314 = vmatpush1.bf16.msra.mxu0 %v292
    %315 = vmatprep.subr.bf16.mxu0 0
    %316 = vmatpush1.bf16.msra.mxu0 %v291
    %317 = vmatprep.subr.bf16.mxu0 0
    %318 = vmatpush1.bf16.msra.mxu0 %v290
    %319 = vmatprep.subr.bf16.mxu0 0
    %320 = vmatpush1.bf16.msra.mxu0 %v289
    %321 = vmatprep.subr.bf16.mxu0 0
    %322 = vmatpush2.bf16.msra.mxu0 0
    %323 = vmatprep.subr.bf16.mxu0 0
    %324 = vmatpush2.bf16.msra.mxu0 0
    %325 = vmatprep.subr.bf16.mxu0 0
    %326 = vmatpush2.bf16.msra.mxu0 0
    %327 = vmatprep.subr.bf16.mxu0 0
    %328 = vmatpush2.bf16.msra.mxu0 0
    %329 = vmatprep.subr.bf16.mxu0 0
    %330 = vmatpush2.bf16.msra.mxu0 0
    %331 = vmatprep.subr.bf16.mxu0 0
    %332 = vmatpush2.bf16.msra.mxu0 0
    %333 = vmatprep.subr.bf16.mxu0 0
    %334 = vmatpush2.bf16.msra.mxu0 0
    %335 = vmatprep.subr.bf16.mxu0 0
    %336 = vmatpush2.bf16.msra.mxu0 0
    %337 = vmatprep.mubr.bf16.mxu0 0
    %338 = vmatmul.mubr.bf16.gmra.mxu0 %v233
    %v339 = vpop.f32.mrf.mxu0
    %v340 = vadd.f32 %v255, %v339
    %v341 = vpop.f32.mrf.mxu0
    %v342 = vpop.f32.mrf.mxu0
    %v343 = vadd.f32 %v255, %v342
    %v344 = vpop.f32.mrf.mxu0
    %345 = vdwg.mxu0
    %v346 = vadd.f32 %v340, %v69
    %v347 = vadd.f32 %v343, %v70
    %348 = vst [vmem:[#allocation8] sm:$0xff] %v346
    %349 = vst [vmem:[#allocation8 + $0x8] sm:$0xff] %v347
    // Predicated region
    $region42: #{tpu_custom_call.1} parent=1 // pred_check
      _
    $region43: #{tpu_custom_call.1} parent=1 // pred_check_branch
      %351 = sbr.rel (0) target = $region45
    $region44: #{tpu_custom_call.1} parent=1 // pred_region
      %s353 = ssub.s32 256, 256
      %354 = vsyncadd [#allocation4], %s353
      %s355 = sshll.u32 [#allocation8], 4
      %s356 = int_to_ptr.vmem [resolvable:$true] %s355
      %361 = dma.vmem_to_hbm [thread:$0]  %s356, 256, %s7, [#allocation4], 128, 128, 8
    $region45: #{tpu_custom_call.1} parent=1 // pred_fallthru
      _
    // Predicated region
    $region46: #{tpu_custom_call.1} parent=1 // pred_check
      _
    $region47: #{tpu_custom_call.1} parent=1 // pred_check_branch
      %363 = sbr.rel (0) target = $region49
    $region48: #{tpu_custom_call.1} parent=1 // pred_region
      %364 = dma.done [#allocation4], 256
    $region49: #{tpu_custom_call.1} parent=1 // pred_fallthru
      _
    %365 = vsyncpa [#allocation3], 1
    %366 = vsyncpa [#allocation6], 1
    %367 = vsyncpa [#allocation4], 1

// kernel: tpu_custom_call.1
$region0: #{tpu_custom_call.1}
  #allocation0 [shape = 'u32[]', space=smem, size = 0x4, offset = 0x4, fixed_abs, tag = 'smem constant byte address 0x4 - core index']
  #allocation1 [shape = 'u32[144,128]{1,0:T(1,128)}', space=vmem, size = 0x12000, scoped, tag = 'internal scratch']
  %s0 = inlined_call_operand.hbm [shape: f32[16,128], index: 0, kind: input, shape index: {}]
  %s1 = inlined_call_operand.vmem [shape: f32[1,128], index: 1, kind: input, shape index: {}]
  %s2 = inlined_call_operand.vmem [shape: f32[1,128], index: 2, kind: input, shape index: {}]
  %s3 = inlined_call_operand.hbm [shape: bf16[128,128], index: 3, kind: input, shape index: {}]
  %s4 = inlined_call_operand.vmem [shape: f32[1,128], index: 4, kind: input, shape index: {}]
  %s5 = inlined_call_operand.hbm [shape: bf16[128,128], index: 5, kind: input, shape index: {}]
  %s6 = inlined_call_operand.vmem [shape: f32[1,128], index: 6, kind: input, shape index: {}]
  %s7 = inlined_call_operand.hbm [shape: f32[16,128], index: 7, kind: output, shape index: {}]
  %s8 = sld [smem:[#allocation0]]
  $region50: #{tpu_custom_call.1} parent=0
    _
  %s10 = ssub.s32 1, %s8
  %s11 = scalar_select 0, %s10, %s8
  $region1: #{tpu_custom_call.1} parent=0
    #allocation2 [shape = 'u8[8192]{0}', space=vmem, size = 0x2000, scoped, tag = 'input window, operand 0, single buffered']
    #allocation3 [shape = 's32[1]{0}', space=sflag, size = 0x4, scoped, tag = 'scoped memory for tpu_custom_call.1']
    #allocation4 [shape = 's32[1]{0}', space=sflag, size = 0x4, scoped, tag = 'scoped memory for tpu_custom_call.1']
    #allocation5 [shape = 'u8[32768]{0}', space=vmem, size = 0x8000, scoped, tag = 'input window, operand 3, single buffered']
    #allocation6 [shape = 's32[1]{0}', space=sflag, size = 0x4, scoped, tag = 'scoped memory for tpu_custom_call.1']
    #allocation7 [shape = 'u8[32768]{0}', space=vmem, size = 0x8000, scoped, tag = 'input window, operand 5, single buffered']
    #allocation8 [shape = 'u8[8192]{0}', space=vmem, size = 0x2000, scoped, tag = 'output window, operand 0, single buffered']
    %12 = vsyncpa [#allocation3], 0
    %13 = vsyncpa [#allocation6], 0
    %14 = vsyncpa [#allocation4], 0
    // Predicated region
    $region2: #{tpu_custom_call.1} parent=1 // pred_check
      _
    $region3: #{tpu_custom_call.1} parent=1 // pred_check_branch
      %16 = sbr.rel (0) target = $region5
    $region4: #{tpu_custom_call.1} parent=1 // pred_region
      %s18 = ssub.s32 256, 256
      %19 = vsyncadd [#allocation3], %s18
      %s20 = sshll.u32 [#allocation2], 4
      %s21 = int_to_ptr.vmem [resolvable:$true] %s20
      %26 = dma.hbm_to_vmem [thread:$0]  %s0, 256, %s21, [#allocation3], 128, 128, 8
    $region5: #{tpu_custom_call.1} parent=1 // pred_fallthru
      _
    // Predicated region
    $region6: #{tpu_custom_call.1} parent=1 // pred_check
      _
    $region7: #{tpu_custom_call.1} parent=1 // pred_check_branch
      %28 = sbr.rel (0) target = $region9
    $region8: #{tpu_custom_call.1} parent=1 // pred_region
      _
    $region9: #{tpu_custom_call.1} parent=1 // pred_fallthru
      _
    // Predicated region
    $region10: #{tpu_custom_call.1} parent=1 // pred_check
      _
    $region11: #{tpu_custom_call.1} parent=1 // pred_check_branch
      %30 = sbr.rel (0) target = $region13
    $region12: #{tpu_custom_call.1} parent=1 // pred_region
      _
    $region13: #{tpu_custom_call.1} parent=1 // pred_fallthru
      _
    // Predicated region
    $region14: #{tpu_custom_call.1} parent=1 // pred_check
      _
    $region15: #{tpu_custom_call.1} parent=1 // pred_check_branch
      %32 = sbr.rel (0) target = $region17
    $region16: #{tpu_custom_call.1} parent=1 // pred_region
      %s34 = ssub.s32 1024, 1024
      %35 = vsyncadd [#allocation6], %s34
      %s36 = sshll.u32 [#allocation5], 4
      %s37 = int_to_ptr.vmem [resolvable:$true] %s36
      %42 = dma.hbm_to_vmem [thread:$0]  %s3, 1024, %s37, [#allocation6], 64, 64, 4
    $region17: #{tpu_custom_call.1} parent=1 // pred_fallthru
      _
    // Predicated region
    $region18: #{tpu_custom_call.1} parent=1 // pred_check
      _
    $region19: #{tpu_custom_call.1} parent=1 // pred_check_branch
      %44 = sbr.rel (0) target = $region21
    $region20: #{tpu_custom_call.1} parent=1 // pred_region
      _
    $region21: #{tpu_custom_call.1} parent=1 // pred_fallthru
      _
    // Predicated region
    $region22: #{tpu_custom_call.1} parent=1 // pred_check
      _
    $region23: #{tpu_custom_call.1} parent=1 // pred_check_branch
      %46 = sbr.rel (0) target = $region25
    $region24: #{tpu_custom_call.1} parent=1 // pred_region
      %s48 = ssub.s32 1024, 1024
      %49 = vsyncadd [#allocation6], %s48
      %s50 = sshll.u32 [#allocation7], 4
      %s51 = int_to_ptr.vmem [resolvable:$true] %s50
      %56 = dma.hbm_to_vmem [thread:$0]  %s5, 1024, %s51, [#allocation6], 64, 64, 4
    $region25: #{tpu_custom_call.1} parent=1 // pred_fallthru
      _
    // Predicated region
    $region26: #{tpu_custom_call.1} parent=1 // pred_check
      _
    $region27: #{tpu_custom_call.1} parent=1 // pred_check_branch
      %58 = sbr.rel (0) target = $region29
    $region28: #{tpu_custom_call.1} parent=1 // pred_region
      _
    $region29: #{tpu_custom_call.1} parent=1 // pred_fallthru
      _
    // Predicated region
    $region30: #{tpu_custom_call.1} parent=1 // pred_check
      _
    $region31: #{tpu_custom_call.1} parent=1 // pred_check_branch
      %60 = sbr.rel (0) target = $region33
    $region32: #{tpu_custom_call.1} parent=1 // pred_region
      %61 = dma.done [#allocation3], 256
    $region33: #{tpu_custom_call.1} parent=1 // pred_fallthru
      _
    // Predicated region
    $region34: #{tpu_custom_call.1} parent=1 // pred_check
      _
    $region35: #{tpu_custom_call.1} parent=1 // pred_check_branch
      %63 = sbr.rel (0) target = $region37
    $region36: #{tpu_custom_call.1} parent=1 // pred_region
      %64 = dma.done [#allocation6], 1024
    $region37: #{tpu_custom_call.1} parent=1 // pred_fallthru
      _
    // Predicated region
    $region38: #{tpu_custom_call.1} parent=1 // pred_check
      _
    $region39: #{tpu_custom_call.1} parent=1 // pred_check_branch
      %66 = sbr.rel (0) target = $region41
    $region40: #{tpu_custom_call.1} parent=1 // pred_region
      %67 = dma.done [#allocation6], 1024
    $region41: #{tpu_custom_call.1} parent=1 // pred_fallthru
      _
    %v69 = vld [vmem:[#allocation2] sm:$0xff]
    %v70 = vld [vmem:[#allocation2 + $0x8] sm:$0xff]
    %71 = vadd.xlane.f32.xlu0 %v69
    %v72 = vpop.xlane.xlu0 %71
    %73 = vadd.xlane.f32.xlu0 %v70
    %v74 = vpop.xlane.xlu0 %73
    %v75 = vmul.f32 %v72, 0.03125
    %v76 = vmul.f32 %v74, 0.03125
    %v77 = vsub.f32 %v69, %v75
    %v78 = vsub.f32 %v70, %v76
    %v79 = vlaneseq
    %v80 = vand.u32 %v79, 127
    %vm81 = vcmp.lt.s32.totalorder %v80, 32
    %v82 = vsel %vm81, 1, 0
    %vm83 = vcmp.eq.s32.totalorder %v82, 1
    %v84 = vsel %vm83, %v77, 0.0
    %v85 = vsel %vm83, %v78, 0.0
    %v86 = vmul.f32 %v84, %v84
    %v87 = vmul.f32 %v85, %v85
    %88 = vadd.xlane.f32.xlu0 %v86
    %v89 = vpop.xlane.xlu0 %88
    %90 = vadd.xlane.f32.xlu0 %v87
    %v91 = vpop.xlane.xlu0 %90
    %v92 = vmul.f32 %v89, 0.03125
    %v93 = vmul.f32 %v91, 0.03125
    %v94 = vadd.f32 %v92, 1e-05
    %v95 = vadd.f32 %v93, 1e-05
    %v96 = vrsqrt.pop %v94
    %v97 = vrsqrt.pop %v95
    %v98 = vmul.f32 %v84, %v96
    %v99 = vmul.f32 %v85, %v97
    %v100 = vld [vmem:[%s1] sm:$0x1]
    %v102 = vlaneseq
    %v103 = vshrl.u32 %v102, 7
    %v104 = vsub.s32 0, %v103
    %v105 = vrot.slane %v100, %v104
    %v107 = vmul.f32 %v98, %v105
    %v108 = vmul.f32 %v99, %v105
    %v109 = vld [vmem:[%s2] sm:$0x1]
    %v111 = vlaneseq
    %v112 = vshrl.u32 %v111, 7
    %v113 = vsub.s32 0, %v112
    %v114 = vrot.slane %v109, %v113
    %v116 = vadd.f32 %v107, %v114
    %v117 = vadd.f32 %v108, %v114
    %v118 = vpack.c.bf16 %v117, %v116
    %v119 = vld [vmem:[#allocation5] sm:$0xf]
    %v120 = vld [vmem:[#allocation5 + $0x4] sm:$0xf]
    %v121 = vld [vmem:[#allocation5 + $0x8] sm:$0xf]
    %v122 = vld [vmem:[#allocation5 + $0xc] sm:$0xf]
    %v123 = vld [vmem:[#allocation5 + $0x10] sm:$0xf]
    %v124 = vld [vmem:[#allocation5 + $0x14] sm:$0xf]
    %v125 = vld [vmem:[#allocation5 + $0x18] sm:$0xf]
    %v126 = vld [vmem:[#allocation5 + $0x1c] sm:$0xf]
    %v127 = vld [vmem:[#allocation5 + $0x20] sm:$0xf]
    %v128 = vld [vmem:[#allocation5 + $0x24] sm:$0xf]
    %v129 = vld [vmem:[#allocation5 + $0x28] sm:$0xf]
    %v130 = vld [vmem:[#allocation5 + $0x2c] sm:$0xf]
    %v131 = vld [vmem:[#allocation5 + $0x30] sm:$0xf]
    %v132 = vld [vmem:[#allocation5 + $0x34] sm:$0xf]
    %v133 = vld [vmem:[#allocation5 + $0x38] sm:$0xf]
    %v134 = vld [vmem:[#allocation5 + $0x3c] sm:$0xf]
    %v135 = vld [vmem:[%s4] sm:$0x1]
    %v137 = vlaneseq
    %v138 = vshrl.u32 %v137, 7
    %v139 = vsub.s32 0, %v138
    %v140 = vrot.slane %v135, %v139
    %v158 = vunpack.c.l.b16 %v119
    %v159 = vunpack.c.l.b16 %v120
    %v160 = vunpack.c.l.b16 %v121
    %v161 = vunpack.c.l.b16 %v122
    %v162 = vunpack.c.l.b16 %v123
    %v163 = vunpack.c.l.b16 %v124
    %v164 = vunpack.c.l.b16 %v125
    %v165 = vunpack.c.l.b16 %v126
    %v166 = vunpack.c.l.b16 %v127
    %v167 = vunpack.c.l.b16 %v128
    %v168 = vunpack.c.l.b16 %v129
    %v169 = vunpack.c.l.b16 %v130
    %v170 = vunpack.c.l.b16 %v131
    %v171 = vunpack.c.l.b16 %v132
    %v172 = vunpack.c.l.b16 %v133
    %v173 = vunpack.c.l.b16 %v134
    %v174 = vpack.c.b16 %v159, %v158
    %v175 = vpack.c.b16 %v161, %v160
    %v176 = vpack.c.b16 %v163, %v162
    %v177 = vpack.c.b16 %v165, %v164
    %v178 = vpack.c.b16 %v167, %v166
    %v179 = vpack.c.b16 %v169, %v168
    %v180 = vpack.c.b16 %v171, %v170
    %v181 = vpack.c.b16 %v173, %v172
    %190 = vmatprep.subr.bf16.mxu0 0
    %191 = vmatpush1.bf16.msra.mxu0 %v181
    %192 = vmatprep.subr.bf16.mxu0 0
    %193 = vmatpush1.bf16.msra.mxu0 %v180
    %194 = vmatprep.subr.bf16.mxu0 0
    %195 = vmatpush1.bf16.msra.mxu0 %v179
    %196 = vmatprep.subr.bf16.mxu0 0
    %197 = vmatpush1.bf16.msra.mxu0 %v178
    %198 = vmatprep.subr.bf16.mxu0 0
    %199 = vmatpush1.bf16.msra.mxu0 %v177
    %200 = vmatprep.subr.bf16.mxu0 0
    %201 = vmatpush1.bf16.msra.mxu0 %v176
    %202 = vmatprep.subr.bf16.mxu0 0
    %203 = vmatpush1.bf16.msra.mxu0 %v175
    %204 = vmatprep.subr.bf16.mxu0 0
    %205 = vmatpush1.bf16.msra.mxu0 %v174
    %206 = vmatprep.subr.bf16.mxu0 0
    %207 = vmatpush2.bf16.msra.mxu0 0
    %208 = vmatprep.subr.bf16.mxu0 0
    %209 = vmatpush2.bf16.msra.mxu0 0
    %210 = vmatprep.subr.bf16.mxu0 0
    %211 = vmatpush2.bf16.msra.mxu0 0
    %212 = vmatprep.subr.bf16.mxu0 0
    %213 = vmatpush2.bf16.msra.mxu0 0
    %214 = vmatprep.subr.bf16.mxu0 0
    %215 = vmatpush2.bf16.msra.mxu0 0
    %216 = vmatprep.subr.bf16.mxu0 0
    %217 = vmatpush2.bf16.msra.mxu0 0
    %218 = vmatprep.subr.bf16.mxu0 0
    %219 = vmatpush2.bf16.msra.mxu0 0
    %220 = vmatprep.subr.bf16.mxu0 0
    %221 = vmatpush2.bf16.msra.mxu0 0
    %222 = vmatprep.mubr.bf16.mxu0 0
    %223 = vmatmul.mubr.bf16.gmra.mxu0 %v118
    %v224 = vpop.f32.mrf.mxu0
    %v225 = vadd.f32 %v140, %v224
    %v226 = vpop.f32.mrf.mxu0
    %v227 = vpop.f32.mrf.mxu0
    %v228 = vadd.f32 %v140, %v227
    %v229 = vpop.f32.mrf.mxu0
    %230 = vdwg.mxu0
    %v231 = vmax.f32 %v225, 0.0
    %v232 = vmax.f32 %v228, 0.0
    %v233 = vpack.c.bf16 %v232, %v231
    %v234 = vld [vmem:[#allocation7] sm:$0xf]
    %v235 = vld [vmem:[#allocation7 + $0x4] sm:$0xf]
    %v236 = vld [vmem:[#allocation7 + $0x8] sm:$0xf]
    %v237 = vld [vmem:[#allocation7 + $0xc] sm:$0xf]
    %v238 = vld [vmem:[#allocation7 + $0x10] sm:$0xf]
    %v239 = vld [vmem:[#allocation7 + $0x14] sm:$0xf]
    %v240 = vld [vmem:[#allocation7 + $0x18] sm:$0xf]
    %v241 = vld [vmem:[#allocation7 + $0x1c] sm:$0xf]
    %v242 = vld [vmem:[#allocation7 + $0x20] sm:$0xf]
    %v243 = vld [vmem:[#allocation7 + $0x24] sm:$0xf]
    %v244 = vld [vmem:[#allocation7 + $0x28] sm:$0xf]
    %v245 = vld [vmem:[#allocation7 + $0x2c] sm:$0xf]
    %v246 = vld [vmem:[#allocation7 + $0x30] sm:$0xf]
    %v247 = vld [vmem:[#allocation7 + $0x34] sm:$0xf]
    %v248 = vld [vmem:[#allocation7 + $0x38] sm:$0xf]
    %v249 = vld [vmem:[#allocation7 + $0x3c] sm:$0xf]
    %v250 = vld [vmem:[%s6] sm:$0x1]
    %v252 = vlaneseq
    %v253 = vshrl.u32 %v252, 7
    %v254 = vsub.s32 0, %v253
    %v255 = vrot.slane %v250, %v254
    %v273 = vunpack.c.l.b16 %v234
    %v274 = vunpack.c.l.b16 %v235
    %v275 = vunpack.c.l.b16 %v236
    %v276 = vunpack.c.l.b16 %v237
    %v277 = vunpack.c.l.b16 %v238
    %v278 = vunpack.c.l.b16 %v239
    %v279 = vunpack.c.l.b16 %v240
    %v280 = vunpack.c.l.b16 %v241
    %v281 = vunpack.c.l.b16 %v242
    %v282 = vunpack.c.l.b16 %v243
    %v283 = vunpack.c.l.b16 %v244
    %v284 = vunpack.c.l.b16 %v245
    %v285 = vunpack.c.l.b16 %v246
    %v286 = vunpack.c.l.b16 %v247
    %v287 = vunpack.c.l.b16 %v248
    %v288 = vunpack.c.l.b16 %v249
    %v289 = vpack.c.b16 %v274, %v273
    %v290 = vpack.c.b16 %v276, %v275
    %v291 = vpack.c.b16 %v278, %v277
    %v292 = vpack.c.b16 %v280, %v279
    %v293 = vpack.c.b16 %v282, %v281
    %v294 = vpack.c.b16 %v284, %v283
    %v295 = vpack.c.b16 %v286, %v285
    %v296 = vpack.c.b16 %v288, %v287
    %305 = vmatprep.subr.bf16.mxu0 0
    %306 = vmatpush1.bf16.msra.mxu0 %v296
    %307 = vmatprep.subr.bf16.mxu0 0
    %308 = vmatpush1.bf16.msra.mxu0 %v295
    %309 = vmatprep.subr.bf16.mxu0 0
    %310 = vmatpush1.bf16.msra.mxu0 %v294
    %311 = vmatprep.subr.bf16.mxu0 0
    %312 = vmatpush1.bf16.msra.mxu0 %v293
    %313 = vmatprep.subr.bf16.mxu0 0
    %314 = vmatpush1.bf16.msra.mxu0 %v292
    %315 = vmatprep.subr.bf16.mxu0 0
    %316 = vmatpush1.bf16.msra.mxu0 %v291
    %317 = vmatprep.subr.bf16.mxu0 0
    %318 = vmatpush1.bf16.msra.mxu0 %v290
    %319 = vmatprep.subr.bf16.mxu0 0
    %320 = vmatpush1.bf16.msra.mxu0 %v289
    %321 = vmatprep.subr.bf16.mxu0 0
    %322 = vmatpush2.bf16.msra.mxu0 0
    %323 = vmatprep.subr.bf16.mxu0 0
    %324 = vmatpush2.bf16.msra.mxu0 0
    %325 = vmatprep.subr.bf16.mxu0 0
    %326 = vmatpush2.bf16.msra.mxu0 0
    %327 = vmatprep.subr.bf16.mxu0 0
    %328 = vmatpush2.bf16.msra.mxu0 0
    %329 = vmatprep.subr.bf16.mxu0 0
    %330 = vmatpush2.bf16.msra.mxu0 0
    %331 = vmatprep.subr.bf16.mxu0 0
    %332 = vmatpush2.bf16.msra.mxu0 0
    %333 = vmatprep.subr.bf16.mxu0 0
    %334 = vmatpush2.bf16.msra.mxu0 0
    %335 = vmatprep.subr.bf16.mxu0 0
    %336 = vmatpush2.bf16.msra.mxu0 0
    %337 = vmatprep.mubr.bf16.mxu0 0
    %338 = vmatmul.mubr.bf16.gmra.mxu0 %v233
    %v339 = vpop.f32.mrf.mxu0
    %v340 = vadd.f32 %v255, %v339
    %v341 = vpop.f32.mrf.mxu0
    %v342 = vpop.f32.mrf.mxu0
    %v343 = vadd.f32 %v255, %v342
    %v344 = vpop.f32.mrf.mxu0
    %345 = vdwg.mxu0
    %v346 = vadd.f32 %v340, %v69
    %v347 = vadd.f32 %v343, %v70
    %348 = vst [vmem:[#allocation8] sm:$0xff] %v346
    %349 = vst [vmem:[#allocation8 + $0x8] sm:$0xff] %v347
    // Predicated region
    $region42: #{tpu_custom_call.1} parent=1 // pred_check
      _
    $region43: #{tpu_custom_call.1} parent=1 // pred_check_branch
      %351 = sbr.rel (0) target = $region45
    $region44: #{tpu_custom_call.1} parent=1 // pred_region
      %s353 = ssub.s32 256, 256
      %354 = vsyncadd [#allocation4], %s353
      %s355 = sshll.u32 [#allocation8], 4
      %s356 = int_to_ptr.vmem [resolvable:$true] %s355
      %361 = dma.vmem_to_hbm [thread:$0]  %s356, 256, %s7, [#allocation4], 128, 128, 8
    $region45: #{tpu_custom_call.1} parent=1 // pred_fallthru
      _
    // Predicated region
    $region46: #{tpu_custom_call.1} parent=1 // pred_check
      _
    $region47: #{tpu_custom_call.1} parent=1 // pred_check_branch
      %363 = sbr.rel (0) target = $region49
    $region48: #{tpu_custom_call.1} parent=1 // pred_region
      %364 = dma.done [#allocation4], 256
    $region49: #{tpu_custom_call.1} parent=1 // pred_fallthru
      _
    %365 = vsyncpa [#allocation3], 1
    %366 = vsyncpa [#allocation6], 1
    %367 = vsyncpa [#allocation4], 1

</llo_original>
